<compile_context>
chip_gen: v7x
topology: tpu7x:2x2x1
jax: 0.10.0
libtpu: 0.0.40
codegen_flags: <defaults>
</compile_context>

<pallas_src>
import functools

import jax
import jax.numpy as jnp
from jax.experimental import pallas as pl
from jax.experimental.pallas import tpu as pltpu


def _round_up(v, m):
    return -(-v // m) * m


# ---------------------------------------------------------------------------
# Fused kernel: polyphase conv-as-matmul + BatchNorm partial statistics.
#
#   w_ref     : [k2*k2, Cout, c4] bf16  per-tap-offset weight matrices (resident)
#   mask_ref  : [1, tm]           bf16  1.0 on valid output lanes, 0.0 on skew/pad lanes
#   p_ref     : [c4, tm]          bf16  polyphase input, current lane tile
#   pn_ref    : [c4, ext]         bf16  head of the next lane tile (for the shifted windows)
#   conv_ref  : [Cout, tm]        bf16  raw conv output tile (Wh-strided flattened layout)
#   stats_ref : [2*Cout, 128]     f32   rows [0:Cout] = sum, [Cout:2Cout] = sum of squares
# ---------------------------------------------------------------------------
def _conv_bn_stats_kernel(w_ref, mask_ref, p_ref, pn_ref, conv_ref, stats_ref, *, wh, k2):
    tm = conv_ref.shape[-1]
    # Current tile plus the next tile's head: the shifted windows never run out of data.
    pcat = jnp.concatenate([p_ref[...], pn_ref[...]], axis=-1)      # [c4, tm + ext] bf16

    acc = None
    for a in range(k2):
        for b in range(k2):
            delta = a * wh + b                                      # static lane shift
            win = pcat[:, delta:delta + tm]                         # [c4, tm] bf16
            part = jnp.dot(w_ref[a * k2 + b], win,
                           preferred_element_type=jnp.float32)      # [Cout, tm] f32 (MXU)
            acc = part if acc is None else acc + part

    # BN partial statistics from the f32 accumulator; skewed / padded lanes masked out.
    m = mask_ref[...].astype(jnp.float32)                           # [1, tm]
    am = acc * m
    ssum = jnp.sum(am, axis=1, keepdims=True)                       # [Cout, 1]
    sqsum = jnp.sum(am * acc, axis=1, keepdims=True)                # [Cout, 1]  (= sum mask*acc^2)
    st = jnp.concatenate([ssum, sqsum], axis=0)                     # [2*Cout, 1]
    stats_ref[...] = jnp.broadcast_to(st, (st.shape[0], 128))       # lane-dense, unmasked store

    # bf16 conv intermediate (stats above already came from the f32 accumulator).
    conv_ref[...] = acc.astype(conv_ref.dtype)


def _vmem_budget_bytes():
    """Per-generation VMEM budget (v7x has 64 MiB/TC vs 128 MiB on v5e/v6e)."""
    try:
        cap = getattr(pltpu.get_tpu_info(), "vmem_capacity_bytes", None)
    except Exception:
        cap = None
    if not cap:
        cap = 64 * 1024 * 1024                      # assume the smallest (v7x-class) if unknown
    vmem_limit = min(cap // 2, 96 * 1024 * 1024)    # scoped VMEM limit handed to Mosaic
    budget = int(vmem_limit * 0.6)                  # tile working-set budget (compiler headroom)
    return budget, vmem_limit


def _choose_tm(s1, c4, cout, ext, budget, max_tm=16384):
    """Largest lane tile (multiple of `ext`, capped) whose working set fits the budget."""
    # Per output lane: double-buffered bf16 phase tile + mask + bf16 conv tile, plus in-kernel
    # temporaries (pcat, shifted-window copies, f32 accumulator and its masked copy).
    per_lane = 10 * c4 + 16 * cout + 8
    tm = (budget // max(per_lane, 1)) // ext * ext
    cap = max(ext, (max_tm // ext) * ext)
    tm = max(ext, min(tm, cap))
    return min(tm, _round_up(s1, ext))


def conv2d_block(x, weight, gamma, beta, *, kernel_size=4, stride=2,
                 pad=(1, 1, 1, 1), eps=1e-5, negative_slope=0.2):
    """x: [B, Cin, H, W] (NCHW, like PyTorch). Returns LeakyReLU(BN(Conv(ReflectPad(x))))."""
    B, Cin, H, W = x.shape
    Cout = weight.shape[0]
    k, s = kernel_size, stride
    assert k % s == 0, "phase-decomposed fused conv requires kernel_size % stride == 0"
    k2 = k // s
    pad_l, pad_r, pad_t, pad_b = pad                  # PyTorch ReflectionPad2d order

    # Reflection pad, then repack into the stride-phase ("polyphase") layout - a single cheap XLA
    # copy fusion; total bytes ~= x_pad in bf16 (no im2col inflation).
    # TODO(synk): the pad + polyphase repack could also be pulled into the kernel with manual DMA
    # of raw x rows, removing this last XLA copy over the input.
    xp = jnp.pad(x, ((0, 0), (0, 0), (pad_t, pad_b), (pad_l, pad_r)), mode="reflect")
    Hp, Wp = xp.shape[2], xp.shape[3]
    Ho = (Hp - k) // s + 1
    Wo = (Wp - k) // s + 1
    Hp_e, Wp_e = _round_up(Hp, s), _round_up(Wp, s)
    if (Hp_e, Wp_e) != (Hp, Wp):                       # make the parity split exact
        xp = jnp.pad(xp, ((0, 0), (0, 0), (0, Hp_e - Hp), (0, Wp_e - Wp)))
    Hh, Wh = Hp_e // s, Wp_e // s
    c4 = s * s * Cin
    S1 = Ho * Wh                                       # Wh-strided flattened output space

    # P[b, (p*s+q)*Cin+ci, hh*Wh+wh] = xp[b, ci, hh*s+p, wh*s+q]
    ph = xp.reshape(B, Cin, Hh, s, Wh, s).transpose(0, 3, 5, 1, 2, 4)
    ph = ph.reshape(B, c4, Hh * Wh).astype(jnp.bfloat16)

    # Wr[a*k2+b, co, (p*s+q)*Cin+ci] = weight[co, ci, a*s+p, b*s+q]
    wr = weight.reshape(Cout, Cin, k2, s, k2, s).transpose(2, 4, 0, 3, 5, 1)
    wr = wr.reshape(k2 * k2, Cout, c4).astype(jnp.bfloat16)

    max_delta = (k2 - 1) * (Wh + 1)
    ext = _round_up(max_delta + 1, 128)
    budget, vmem_limit = _vmem_budget_bytes()
    tm = _choose_tm(S1, c4, Cout, ext, budget)
    n_m = -(-S1 // tm)
    S1_pad = n_m * tm

    # Phase data padded with zeros (or truncated) to S1_pad + tm lanes so the "next tile head"
    # block is always in range; the dropped/added lanes are never used by valid outputs.
    target = S1_pad + tm
    if target >= Hh * Wh:
        P = jnp.pad(ph, ((0, 0), (0, 0), (0, target - Hh * Wh)))
    else:
        P = ph[:, :, :target]

    # Validity mask over the Wh-strided flattened output positions (skew columns + tail = 0).
    sidx = jnp.arange(S1_pad, dtype=jnp.int32)
    mask = (((sidx % Wh) < Wo) & (sidx < S1)).astype(jnp.bfloat16).reshape(1, S1_pad)

    grid = (n_m, B)                                    # spatial tiles lead: the axis that grows
                                                       # with the problem is the primary parallel
    kernel = functools.partial(_conv_bn_stats_kernel, wh=Wh, k2=k2)
    conv_flat, stats = pl.pallas_call(
        kernel,
        out_shape=(
            jax.ShapeDtypeStruct((B, Cout, S1_pad), jnp.bfloat16),        # bf16 conv intermediate
            jax.ShapeDtypeStruct((n_m, B, 2 * Cout, 128), jnp.float32),   # per-tile BN partials
        ),
        grid=grid,
        in_specs=[
            pl.BlockSpec((k2 * k2, Cout, c4), lambda m, b: (0, 0, 0)),    # weights: resident
            pl.BlockSpec((1, tm), lambda m, b: (0, m)),                   # validity mask tile
            pl.BlockSpec((None, c4, tm), lambda m, b: (b, 0, m)),         # phase tile
            pl.BlockSpec((None, c4, ext),                                 # next tile's head
                         lambda m, b: (b, 0, (m + 1) * (tm // ext))),
        ],
        out_specs=(
            pl.BlockSpec((None, Cout, tm), lambda m, b: (b, 0, m)),
            pl.BlockSpec((None, None, 2 * Cout, 128), lambda m, b: (m, b, 0, 0)),
        ),
        compiler_params=pltpu.CompilerParams(
            dimension_semantics=("parallel", "parallel"),
            vmem_limit_bytes=vmem_limit,
        ),
        cost_estimate=pl.CostEstimate(
            flops=2 * B * S1_pad * c4 * Cout * (k2 * k2),
            transcendentals=0,
            bytes_accessed=int(B * c4 * (S1_pad + n_m * ext) * 2 + B * Cout * S1_pad * 2
                               + n_m * B * 2 * Cout * 128 * 4 + wr.size * 2 + S1_pad * 2),
        ),
    )(wr, mask, P, P)

    # Finish BatchNorm2d (training-mode) statistics over N*Ho*Wo per channel (tiny XLA reduce).
    tot = jnp.sum(stats[:, :, :, 0], axis=(0, 1))      # [2*Cout]
    count = jnp.float32(B * Ho * Wo)
    mean = tot[:Cout] / count
    var = jnp.maximum(tot[Cout:] / count - mean * mean, 0.0)   # biased variance, like PyTorch
    inv_std = jax.lax.rsqrt(var + eps)
    scale = gamma.astype(jnp.float32) * inv_std
    shift = beta.astype(jnp.float32) - mean * scale
    # TODO(synk): nn.BatchNorm2d running_mean/running_var buffer updates are not produced
    # (the training-mode forward output does not depend on them).

    # BN apply + LeakyReLU + layout compaction as ONE XLA elementwise/slice fusion
    # (perf review: a standalone streaming pass-2 pallas_call cannot fuse with its neighbors).
    conv4 = conv_flat[:, :, :S1].reshape(B, Cout, Ho, Wh)[:, :, :, :Wo].astype(jnp.float32)
    y = conv4 * scale[None, :, None, None] + shift[None, :, None, None]
    out = jnp.where(y >= 0.0, y, negative_slope * y)
    return out.astype(x.dtype)


def _reference(x, weight, gamma, beta, *, stride=2, pad=(1, 1, 1, 1), eps=1e-5, slope=0.2):
    pad_l, pad_r, pad_t, pad_b = pad
    xp = jnp.pad(x, ((0, 0), (0, 0), (pad_t, pad_b), (pad_l, pad_r)), mode="reflect")
    conv = jax.lax.conv_general_dilated(
        xp, weight, window_strides=(stride, stride), padding="VALID",
        dimension_numbers=("NCHW", "OIHW", "NCHW"))
    mean = conv.mean(axis=(0, 2, 3), keepdims=True)
    var = conv.var(axis=(0, 2, 3), keepdims=True)      # biased, like BN in training mode
    y = (conv - mean) * jax.lax.rsqrt(var + eps)
    y = y * gamma[None, :, None, None] + beta[None, :, None, None]
    return jnp.where(y >= 0.0, y, slope * y)


if __name__ == "__main__":
    key = jax.random.PRNGKey(0)
    k_x, k_w = jax.random.split(key)

    B, Cin, H, W = 2, 4, 16, 16
    Cout, ksz, stride = 8, 4, 2

    x = jax.random.normal(k_x, (B, Cin, H, W), dtype=jnp.float32)

    # kaiming_normal_ (fan_in, gain sqrt(2)): std = sqrt(2 / fan_in)
    fan_in = Cin * ksz * ksz
    weight = jax.random.normal(k_w, (Cout, Cin, ksz, ksz), dtype=jnp.float32) * jnp.sqrt(2.0 / fan_in)

    # BatchNorm2d default affine init: gamma=1, beta=0
    gamma = jnp.ones((Cout,), dtype=jnp.float32)
    beta = jnp.zeros((Cout,), dtype=jnp.float32)

    fn = jax.jit(lambda a, w, g, bb: conv2d_block(a, w, g, bb, kernel_size=ksz, stride=stride))
    out = jax.block_until_ready(fn(x, weight, gamma, beta))
    assert out.shape == (B, Cout, H // 2, W // 2), out.shape

    ref = jax.block_until_ready(_reference(x, weight, gamma, beta, stride=stride))
    err = float(jnp.max(jnp.abs(out - ref)))
    assert err < 0.2, f"max abs error vs f32 reference too large: {err}"
    print("KERNEL_OK")
</pallas_src>

<mosaic_0001>
module attributes {stable_mosaic.version = 11 : i64} {
  func.func @_conv_bn_stats_kernel(%arg0: i32, %arg1: i32, %arg2: memref<4x8x16xbf16, #tpu.memory_space<vmem>>, %arg3: memref<1x128xbf16, #tpu.memory_space<vmem>>, %arg4: memref<1x16x128xbf16, #tpu.memory_space<vmem>>, %arg5: memref<1x16x128xbf16, #tpu.memory_space<vmem>>, %arg6: memref<1x8x128xbf16, #tpu.memory_space<vmem>>, %arg7: memref<1x1x16x128xf32, #tpu.memory_space<vmem>>) attributes {dimension_semantics = [#tpu.dimension_semantics<parallel>, #tpu.dimension_semantics<parallel>], iteration_bounds = array<i64: 1, 2>, scalar_prefetch = 0 : i64, scratch_operands = 0 : i64, tpu.core_type = #tpu.core_type<tc>, window_params = [{pipeline_mode = #tpu.pipeline_mode<synchronous>, transform_indices = @transform_0, window_bounds = array<i64: 4, 8, 16>}, {transform_indices = @transform_1, window_bounds = array<i64: 1, 128>}, {transform_indices = @transform_2, window_bounds = array<i64: 1, 16, 128>}, {transform_indices = @transform_3, window_bounds = array<i64: 1, 16, 128>}, {transform_indices = @transform_4, window_bounds = array<i64: 1, 8, 128>}, {transform_indices = @transform_5, window_bounds = array<i64: 1, 1, 16, 128>}]} {
    %c0 = arith.constant 0 : index
    %c0_0 = arith.constant 0 : index
    %c0_1 = arith.constant 0 : index
    %0 = vector.load %arg4[%c0, %c0_0, %c0_1] : memref<1x16x128xbf16, #tpu.memory_space<vmem>>, vector<1x16x128xbf16>
    %1 = vector.shape_cast %0 : vector<1x16x128xbf16> to vector<16x128xbf16>
    %c0_2 = arith.constant 0 : index
    %c0_3 = arith.constant 0 : index
    %c0_4 = arith.constant 0 : index
    %2 = vector.load %arg5[%c0_2, %c0_3, %c0_4] : memref<1x16x128xbf16, #tpu.memory_space<vmem>>, vector<1x16x128xbf16>
    %3 = vector.shape_cast %2 : vector<1x16x128xbf16> to vector<16x128xbf16>
    %4 = tpu.concatenate %1, %3 in 1 : vector<16x128xbf16>, vector<16x128xbf16> -> vector<16x256xbf16>
    %5 = vector.extract_strided_slice %4 {offsets = [0, 0], sizes = [16, 128], strides = [1, 1]} : vector<16x256xbf16> to vector<16x128xbf16>
    %c0_5 = arith.constant 0 : index
    %c0_6 = arith.constant 0 : index
    %c0_7 = arith.constant 0 : index
    %6 = vector.load %arg2[%c0_5, %c0_6, %c0_7] : memref<4x8x16xbf16, #tpu.memory_space<vmem>>, vector<1x8x16xbf16>
    %7 = vector.shape_cast %6 : vector<1x8x16xbf16> to vector<8x16xbf16>
    %cst = arith.constant dense<0.000000e+00> : vector<8x128xf32>
    %8 = tpu.matmul %7, %5, %cst {dimension_numbers = #tpu.dot_dimension_numbers<[1], [0], [0], [1], [0, 0, 1, 1], [], []>} : vector<8x16xbf16>, vector<16x128xbf16>, vector<8x128xf32> -> vector<8x128xf32>
    %9 = vector.extract_strided_slice %4 {offsets = [0, 1], sizes = [16, 128], strides = [1, 1]} : vector<16x256xbf16> to vector<16x128xbf16>
    %c1 = arith.constant 1 : index
    %c0_8 = arith.constant 0 : index
    %c0_9 = arith.constant 0 : index
    %10 = vector.load %arg2[%c1, %c0_8, %c0_9] : memref<4x8x16xbf16, #tpu.memory_space<vmem>>, vector<1x8x16xbf16>
    %11 = vector.shape_cast %10 : vector<1x8x16xbf16> to vector<8x16xbf16>
    %cst_10 = arith.constant dense<0.000000e+00> : vector<8x128xf32>
    %12 = tpu.matmul %11, %9, %cst_10 {dimension_numbers = #tpu.dot_dimension_numbers<[1], [0], [0], [1], [0, 0, 1, 1], [], []>} : vector<8x16xbf16>, vector<16x128xbf16>, vector<8x128xf32> -> vector<8x128xf32>
    %13 = arith.addf %8, %12 : vector<8x128xf32>
    %14 = vector.extract_strided_slice %4 {offsets = [0, 9], sizes = [16, 128], strides = [1, 1]} : vector<16x256xbf16> to vector<16x128xbf16>
    %c2 = arith.constant 2 : index
    %c0_11 = arith.constant 0 : index
    %c0_12 = arith.constant 0 : index
    %15 = vector.load %arg2[%c2, %c0_11, %c0_12] : memref<4x8x16xbf16, #tpu.memory_space<vmem>>, vector<1x8x16xbf16>
    %16 = vector.shape_cast %15 : vector<1x8x16xbf16> to vector<8x16xbf16>
    %cst_13 = arith.constant dense<0.000000e+00> : vector<8x128xf32>
    %17 = tpu.matmul %16, %14, %cst_13 {dimension_numbers = #tpu.dot_dimension_numbers<[1], [0], [0], [1], [0, 0, 1, 1], [], []>} : vector<8x16xbf16>, vector<16x128xbf16>, vector<8x128xf32> -> vector<8x128xf32>
    %18 = arith.addf %13, %17 : vector<8x128xf32>
    %19 = vector.extract_strided_slice %4 {offsets = [0, 10], sizes = [16, 128], strides = [1, 1]} : vector<16x256xbf16> to vector<16x128xbf16>
    %c3 = arith.constant 3 : index
    %c0_14 = arith.constant 0 : index
    %c0_15 = arith.constant 0 : index
    %20 = vector.load %arg2[%c3, %c0_14, %c0_15] : memref<4x8x16xbf16, #tpu.memory_space<vmem>>, vector<1x8x16xbf16>
    %21 = vector.shape_cast %20 : vector<1x8x16xbf16> to vector<8x16xbf16>
    %cst_16 = arith.constant dense<0.000000e+00> : vector<8x128xf32>
    %22 = tpu.matmul %21, %19, %cst_16 {dimension_numbers = #tpu.dot_dimension_numbers<[1], [0], [0], [1], [0, 0, 1, 1], [], []>} : vector<8x16xbf16>, vector<16x128xbf16>, vector<8x128xf32> -> vector<8x128xf32>
    %23 = arith.addf %18, %22 : vector<8x128xf32>
    %c0_17 = arith.constant 0 : index
    %c0_18 = arith.constant 0 : index
    %24 = vector.load %arg3[%c0_17, %c0_18] : memref<1x128xbf16, #tpu.memory_space<vmem>>, vector<1x128xbf16>
    %25 = arith.extf %24 : vector<1x128xbf16> to vector<1x128xf32>
    %26 = vector.broadcast %25 : vector<1x128xf32> to vector<8x128xf32>
    %27 = arith.mulf %23, %26 : vector<8x128xf32>
    %cst_19 = arith.constant dense<0.000000e+00> : vector<8xf32>
    %28 = vector.multi_reduction <add>, %27, %cst_19 [1] : vector<8x128xf32> to vector<8xf32>
    %29 = vector.shape_cast %28 : vector<8xf32> to vector<8x1xf32>
    %30 = arith.mulf %27, %23 : vector<8x128xf32>
    %cst_20 = arith.constant dense<0.000000e+00> : vector<8xf32>
    %31 = vector.multi_reduction <add>, %30, %cst_20 [1] : vector<8x128xf32> to vector<8xf32>
    %32 = vector.shape_cast %31 : vector<8xf32> to vector<8x1xf32>
    %33 = tpu.concatenate %29, %32 in 0 : vector<8x1xf32>, vector<8x1xf32> -> vector<16x1xf32>
    %34 = vector.shape_cast %33 : vector<16x1xf32> to vector<16x1xf32>
    %35 = vector.broadcast %34 : vector<16x1xf32> to vector<16x128xf32>
    %c0_21 = arith.constant 0 : index
    %c0_22 = arith.constant 0 : index
    %c0_23 = arith.constant 0 : index
    %c0_24 = arith.constant 0 : index
    %36 = vector.load %arg7[%c0_21, %c0_22, %c0_23, %c0_24] : memref<1x1x16x128xf32, #tpu.memory_space<vmem>>, vector<1x1x16x128xf32>
    %37 = vector.shape_cast %36 : vector<1x1x16x128xf32> to vector<16x128xf32>
    %38 = vector.shape_cast %35 : vector<16x128xf32> to vector<1x1x16x128xf32>
    tpu.vector_store %arg7[%c0_21, %c0_22, %c0_23, %c0_24], %38 {strides = array<i32>} : memref<1x1x16x128xf32, #tpu.memory_space<vmem>>, vector<1x1x16x128xf32>,
    %39 = arith.truncf %23 : vector<8x128xf32> to vector<8x128xbf16>
    %c0_25 = arith.constant 0 : index
    %c0_26 = arith.constant 0 : index
    %c0_27 = arith.constant 0 : index
    %40 = vector.load %arg6[%c0_25, %c0_26, %c0_27] : memref<1x8x128xbf16, #tpu.memory_space<vmem>>, vector<1x8x128xbf16>
    %41 = vector.shape_cast %40 : vector<1x8x128xbf16> to vector<8x128xbf16>
    %42 = vector.shape_cast %39 : vector<8x128xbf16> to vector<1x8x128xbf16>
    tpu.vector_store %arg6[%c0_25, %c0_26, %c0_27], %42 {strides = array<i32>} : memref<1x8x128xbf16, #tpu.memory_space<vmem>>, vector<1x8x128xbf16>,
    return
  }
  func.func @transform_0(%arg0: i32, %arg1: i32) -> (i32, i32, i32) {
    %c0_i32 = arith.constant 0 : i32
    %c0_i32_0 = arith.constant 0 : i32
    %c0_i32_1 = arith.constant 0 : i32
    %c0_i32_2 = arith.constant 0 : i32
    return %c0_i32, %c0_i32_0, %c0_i32_1 : i32, i32, i32
  }
  func.func @transform_1(%arg0: i32, %arg1: i32) -> (i32, i32) {
    %c0_i32 = arith.constant 0 : i32
    %c0_i32_0 = arith.constant 0 : i32
    return %c0_i32, %arg0 : i32, i32
  }
  func.func @transform_2(%arg0: i32, %arg1: i32) -> (i32, i32, i32) {
    %c0_i32 = arith.constant 0 : i32
    %c0_i32_0 = arith.constant 0 : i32
    return %arg1, %c0_i32, %arg0 : i32, i32, i32
  }
  func.func @transform_3(%arg0: i32, %arg1: i32) -> (i32, i32, i32) {
    %c1_i32 = arith.constant 1 : i32
    %0 = arith.addi %arg0, %c1_i32 : i32
    %c1_i32_0 = arith.constant 1 : i32
    %1 = arith.muli %0, %c1_i32_0 : i32
    %c0_i32 = arith.constant 0 : i32
    %c0_i32_1 = arith.constant 0 : i32
    return %arg1, %c0_i32, %1 : i32, i32, i32
  }
  func.func @transform_4(%arg0: i32, %arg1: i32) -> (i32, i32, i32) {
    %c0_i32 = arith.constant 0 : i32
    %c0_i32_0 = arith.constant 0 : i32
    return %arg1, %c0_i32, %arg0 : i32, i32, i32
  }
  func.func @transform_5(%arg0: i32, %arg1: i32) -> (i32, i32, i32, i32) {
    %c0_i32 = arith.constant 0 : i32
    %c0_i32_0 = arith.constant 0 : i32
    %c0_i32_1 = arith.constant 0 : i32
    return %arg0, %arg1, %c0_i32, %c0_i32_0 : i32, i32, i32, i32
  }
}

</mosaic_0001>

<llo_original>
// kernel: _lambda_.1
$region0: #{_lambda_.1}
  #allocation0 [shape = 'u32[]', space=smem, size = 0x4, offset = 0x4, fixed_abs, tag = 'smem constant byte address 0x4 - core index']
  #allocation1 [shape = 'u32[144,128]{1,0:T(1,128)}', space=vmem, size = 0x12000, scoped, tag = 'internal scratch']
  %s0 = inlined_call_operand.vmem [shape: bf16[4,8,16], index: 0, kind: input, shape index: {}]
  %s1 = inlined_call_operand.vmem [shape: bf16[1,128], index: 1, kind: input, shape index: {}]
  %s2 = inlined_call_operand.vmem [shape: bf16[2,16,256], index: 2, kind: input, shape index: {}, may-alias: {2,3}]
  %s3 = inlined_call_operand.vmem [shape: bf16[2,16,256], index: 3, kind: input, shape index: {}, may-alias: {2,3}]
  %s4 = inlined_call_operand.vmem [shape: bf16[2,8,128], index: 4, kind: output, shape index: {0}]
  %s5 = inlined_call_operand.vmem [shape: f32[1,2,16,128], index: 5, kind: output, shape index: {1}]
  %6 = xla_tuple %s4, %s5
  %s7 = sld [smem:[#allocation0]]
  $region139: #{_lambda_.1} parent=0
    _
  %s9 = ssub.s32 1, %s7
  %s10 = scalar_select 0, %s9, %s7
  $region1: #{_lambda_.1} parent=0
    #allocation2 [shape = 'u8[8192]{0}', space=vmem, size = 0x2000, scoped, tag = 'input window, operand 2']
    #allocation3 [shape = 'u8[8192]{0}', space=vmem, size = 0x2000, scoped, tag = 'input window, operand 3']
    loop: start=0, step=1, limit=4
    $region2: #{_lambda_.1} parent=1 // loop_pre_header
      _
    $region3: #{_lambda_.1} parent=1 // loop_header
      %s12 = sphi 0, %s16
      %p13 = scmp.ge.s32.totalorder %s12, 4
      %s19 = sphi 0, %s31
      %s20 = sphi 0, %s27
      %s21 = sphi 0, %s19
      %s22 = sphi 0, %s20
      %s23 = sphi 0, %s21
      %s24 = sphi 0, %s22
      %s32 = sphi 0, %s32
      %s34 = sphi 0, %s32
      %s35 = sphi 0, %s34
      %s49 = sphi 0, %s35
      %s55 = sphi 0, %s57
      %s58 = sphi 0, %s55
      %s59 = sphi 0, %s58
      %s75 = sphi 0, %s59
      %s83 = sphi 0, %s85
      %s86 = sphi 0, %s83
      %s87 = sphi 0, %s86
      %s103 = sphi 0, %s87
      %s113 = sphi 0, %s115
      %s116 = sphi 0, %s113
      %s117 = sphi 0, %s116
      %s133 = sphi 0, %s117
      %s141 = sphi 0, %s143
      %s144 = sphi 0, %s141
      %s145 = sphi 0, %s144
      %s161 = sphi 0, %s145
      %s169 = sphi 0, %s171
      %s172 = sphi 0, %s169
      %s173 = sphi 0, %s172
      %s189 = sphi 0, %s173
    $region4: #{_lambda_.1} parent=1 // loop_header_branch
      %15 = sbr.rel (%p13) target = $region8
    $region5: #{_lambda_.1} parent=1 // loop_body
      %s17 = ssub.s32 %s12, 1
      %s18 = ssub.s32 %s12, 2
      %s25 = sadd.s32 1, %s20
      %p26 = scmp.ge.s32.totalorder %s25, 2
      %s27 = scalar_select %p26, 0, %s25
      %s28 = sadd.s32 1, %s19
      %s29 = scalar_select %p26, %s28, %s19
      %p30 = scmp.ge.s32.totalorder %s29, 1
      %s31 = scalar_select %p30, 0, %s29
      %s33 = sadd.s32 %s32, 1
      %p36 = scmp.eq.s32.totalorder %s12, 1
      %p37 = scmp.ne.s32.totalorder %s32, %s34
      %p38 = scmp.eq.s32.totalorder %s12, 0
      %p39 = por %p37, %p38
      %p40 = scmp.ne.s32.totalorder %s32, %s34
      %p41 = scmp.eq.s32.totalorder %s17, 1
      %p42 = por %p40, %p41
      %p43 = scmp.ne.s32.totalorder %s34, %s35
      %p44 = scmp.eq.s32.totalorder %s17, 0
      %p45 = por %p43, %p44
      %p46 = scmp.ne.s32.totalorder %s34, %s35
      %p47 = scmp.eq.s32.totalorder %s18, 1
      %p48 = por %p46, %p47
      %p50 = scmp.ne.s32.totalorder %s35, %s49
      %p51 = scmp.eq.s32.totalorder %s18, 0
      %p52 = por %p50, %p51
      %s53 = ssub.s32 %s19, %s31
      %p54 = scmp.eq.s32.totalorder %s53, 0
      %s56 = sadd.s32 %s55, 1
      %s57 = scalar_select %p54, %s55, %s56
      %p60 = pneg %p54
      %p61 = scmp.eq.s32.totalorder %s12, 1
      %p62 = por %p60, %p61
      %p63 = scmp.ne.s32.totalorder %s55, %s58
      %p64 = scmp.eq.s32.totalorder %s12, 0
      %p65 = por %p63, %p64
      %p66 = scmp.ne.s32.totalorder %s55, %s58
      %p67 = scmp.eq.s32.totalorder %s17, 1
      %p68 = por %p66, %p67
      %p69 = scmp.ne.s32.totalorder %s58, %s59
      %p70 = scmp.eq.s32.totalorder %s17, 0
      %p71 = por %p69, %p70
      %p72 = scmp.ne.s32.totalorder %s58, %s59
      %p73 = scmp.eq.s32.totalorder %s18, 1
      %p74 = por %p72, %p73
      %p76 = scmp.ne.s32.totalorder %s59, %s75
      %p77 = scmp.eq.s32.totalorder %s18, 0
      %p78 = por %p76, %p77
      %s79 = ssub.s32 %s20, %s27
      %s80 = ssub.s32 %s19, %s31
      %s81 = sor.u32 %s79, %s80
      %p82 = scmp.eq.s32.totalorder %s81, 0
      %s84 = sadd.s32 %s83, 1
      %s85 = scalar_select %p82, %s83, %s84
      %p88 = pneg %p82
      %p89 = scmp.eq.s32.totalorder %s12, 1
      %p90 = por %p88, %p89
      %p91 = scmp.ne.s32.totalorder %s83, %s86
      %p92 = scmp.eq.s32.totalorder %s12, 0
      %p93 = por %p91, %p92
      %p94 = scmp.ne.s32.totalorder %s83, %s86
      %p95 = scmp.eq.s32.totalorder %s17, 1
      %p96 = por %p94, %p95
      %p97 = scmp.ne.s32.totalorder %s86, %s87
      %p98 = scmp.eq.s32.totalorder %s17, 0
      %p99 = por %p97, %p98
      %p100 = scmp.ne.s32.totalorder %s86, %s87
      %p101 = scmp.eq.s32.totalorder %s18, 1
      %p102 = por %p100, %p101
      %p104 = scmp.ne.s32.totalorder %s87, %s103
      %p105 = scmp.eq.s32.totalorder %s18, 0
      %p106 = por %p104, %p105
      %s107 = sadd.s32 %s19, 1
      %s108 = sadd.s32 %s31, 1
      %s109 = ssub.s32 %s20, %s27
      %s110 = ssub.s32 %s107, %s108
      %s111 = sor.u32 %s109, %s110
      %p112 = scmp.eq.s32.totalorder %s111, 0
      %s114 = sadd.s32 %s113, 1
      %s115 = scalar_select %p112, %s113, %s114
      %p118 = pneg %p112
      %p119 = scmp.eq.s32.totalorder %s12, 1
      %p120 = por %p118, %p119
      %p121 = scmp.ne.s32.totalorder %s113, %s116
      %p122 = scmp.eq.s32.totalorder %s12, 0
      %p123 = por %p121, %p122
      %p124 = scmp.ne.s32.totalorder %s113, %s116
      %p125 = scmp.eq.s32.totalorder %s17, 1
      %p126 = por %p124, %p125
      %p127 = scmp.ne.s32.totalorder %s116, %s117
      %p128 = scmp.eq.s32.totalorder %s17, 0
      %p129 = por %p127, %p128
      %p130 = scmp.ne.s32.totalorder %s116, %s117
      %p131 = scmp.eq.s32.totalorder %s18, 1
      %p132 = por %p130, %p131
      %p134 = scmp.ne.s32.totalorder %s117, %s133
      %p135 = scmp.eq.s32.totalorder %s18, 0
      %p136 = por %p134, %p135
      %s137 = ssub.s32 %s20, %s27
      %s138 = ssub.s32 %s19, %s31
      %s139 = sor.u32 %s137, %s138
      %p140 = scmp.eq.s32.totalorder %s139, 0
      %s142 = sadd.s32 %s141, 1
      %s143 = scalar_select %p140, %s141, %s142
      %p146 = pneg %p140
      %p147 = scmp.eq.s32.totalorder %s12, 1
      %p148 = por %p146, %p147
      %p149 = scmp.ne.s32.totalorder %s141, %s144
      %p150 = scmp.eq.s32.totalorder %s12, 0
      %p151 = por %p149, %p150
      %p152 = scmp.ne.s32.totalorder %s141, %s144
      %p153 = scmp.eq.s32.totalorder %s17, 1
      %p154 = por %p152, %p153
      %p155 = scmp.ne.s32.totalorder %s144, %s145
      %p156 = scmp.eq.s32.totalorder %s17, 0
      %p157 = por %p155, %p156
      %p158 = scmp.ne.s32.totalorder %s144, %s145
      %p159 = scmp.eq.s32.totalorder %s18, 1
      %p160 = por %p158, %p159
      %p162 = scmp.ne.s32.totalorder %s145, %s161
      %p163 = scmp.eq.s32.totalorder %s18, 0
      %p164 = por %p162, %p163
      %s165 = ssub.s32 %s19, %s31
      %s166 = ssub.s32 %s20, %s27
      %s167 = sor.u32 %s165, %s166
      %p168 = scmp.eq.s32.totalorder %s167, 0
      %s170 = sadd.s32 %s169, 1
      %s171 = scalar_select %p168, %s169, %s170
      %p174 = pneg %p168
      %p175 = scmp.eq.s32.totalorder %s12, 1
      %p176 = por %p174, %p175
      %p177 = scmp.ne.s32.totalorder %s169, %s172
      %p178 = scmp.eq.s32.totalorder %s12, 0
      %p179 = por %p177, %p178
      %p180 = scmp.ne.s32.totalorder %s169, %s172
      %p181 = scmp.eq.s32.totalorder %s17, 1
      %p182 = por %p180, %p181
      %p183 = scmp.ne.s32.totalorder %s172, %s173
      %p184 = scmp.eq.s32.totalorder %s17, 0
      %p185 = por %p183, %p184
      %p186 = scmp.ne.s32.totalorder %s172, %s173
      %p187 = scmp.eq.s32.totalorder %s18, 1
      %p188 = por %p186, %p187
      %p190 = scmp.ne.s32.totalorder %s173, %s189
      %p191 = scmp.eq.s32.totalorder %s18, 0
      %p192 = por %p190, %p191
      %p193 = scmp.le.s32.totalorder 1, %s12
      %p194 = scmp.lt.s32.totalorder %s12, 3
      %p195 = pnand %p193, %p194
      %p196 = pneg %p195
      // Predicated region
      $region9: #{_lambda_.1} parent=5 // pred_check
        _
      $region10: #{_lambda_.1} parent=5 // pred_check_branch
        %198 = sbr.rel (%p195) target = $region12
      $region11: #{_lambda_.1} parent=5 // pred_region
        %s199 = ssub.s32 %s12, 1
        // Predicated region
        $region13: #{_lambda_.1} parent=11 // pred_check
          %p200 = pneg %p45
        $region14: #{_lambda_.1} parent=11 // pred_check_branch
          %202 = sbr.rel (%p200) target = $region16
        $region15: #{_lambda_.1} parent=11 // pred_region
          _
        $region16: #{_lambda_.1} parent=11 // pred_fallthru
          _
        // Predicated region
        $region17: #{_lambda_.1} parent=11 // pred_check
          %p203 = pneg %p71
        $region18: #{_lambda_.1} parent=11 // pred_check_branch
          %205 = sbr.rel (%p203) target = $region20
        $region19: #{_lambda_.1} parent=11 // pred_region
          %p206 = scmp.lt.s32.totalorder %s21, 0
          %s207 = scalar_select %p206, %s21, 0
          %s208 = scalar_lea.vmem %s1, %s207
        $region20: #{_lambda_.1} parent=11 // pred_fallthru
          _
      $region12: #{_lambda_.1} parent=5 // pred_fallthru
        _
      %p209 = scmp.lt.s32.totalorder %s12, 2
      // Predicated region
      $region21: #{_lambda_.1} parent=5 // pred_check
        %p210 = pneg %p209
      $region22: #{_lambda_.1} parent=5 // pred_check_branch
        %212 = sbr.rel (%p210) target = $region24
      $region23: #{_lambda_.1} parent=5 // pred_region
        // Predicated region
        $region25: #{_lambda_.1} parent=23 // pred_check
          %p213 = pneg %p93
        $region26: #{_lambda_.1} parent=23 // pred_check_branch
          %215 = sbr.rel (%p213) target = $region28
        $region27: #{_lambda_.1} parent=23 // pred_region
          %s216 = sand.u32 %s83, 1
          %s217 = sand.u32 %s83, 1
          %s218 = smul.addr %s217, 8
          %s219 = scalar_lea.vmem [#allocation2], %s218
          %s220 = smul.addr %s20, 4
          %s221 = sadd.s32 %s19, %s220
          %s222 = smul.addr %s221, 4
          %s223 = scalar_lea.vmem %s2, %s222
          // Predicated region
          $region29: #{_lambda_.1} parent=27 // pred_check
            _
          $region30: #{_lambda_.1} parent=27 // pred_check_branch
            %225 = sbr.rel (0) target = $region32
          $region31: #{_lambda_.1} parent=27 // pred_region
            // Predicated region
            $region33: #{_lambda_.1} parent=31 // pred_check
              _
            $region34: #{_lambda_.1} parent=31 // pred_check_branch
              %227 = sbr.rel target = $region36
            $region35: #{_lambda_.1} parent=31 // pred_region
              // Predicated region
              $region48: #{_lambda_.1} parent=35 // pred_check
                _
              $region49: #{_lambda_.1} parent=35 // pred_check_branch
                %244 = sbr.rel (0) target = $region51
              $region50: #{_lambda_.1} parent=35 // pred_region
                loop: start=0, step=1, limit=1
                $region52: #{_lambda_.1} parent=50 // loop_pre_header
                  _
                $region53: #{_lambda_.1} parent=50 // loop_header
                  %s246 = sphi 0, %s250
                  %p247 = scmp.ge.s32.totalorder %s246, 1
                  %s251 = sphi %s223, %s223
                  %s252 = sphi %s219, %s219
                $region54: #{_lambda_.1} parent=50 // loop_header_branch
                  %249 = sbr.rel (%p247) target = $region58
                $region55: #{_lambda_.1} parent=50 // loop_body
                  _
                $region56: #{_lambda_.1} parent=50 // loop_footer
                  %s250 = sadd.s32 1, %s246
                $region57: #{_lambda_.1} parent=50 // loop_footer_branch
                  %245 = sbr.rel target = $region53
                $region58: #{_lambda_.1} parent=50 // loop_exit
                  _
                loop: start=0, step=1, limit=1
                $region59: #{_lambda_.1} parent=50 // loop_pre_header
                  _
                $region60: #{_lambda_.1} parent=50 // loop_header
                  %s255 = sphi 0, %s259
                  %p256 = scmp.ge.s32.totalorder %s255, 1
                  %s260 = sphi %s223, %s223
                  %s261 = sphi %s219, %s219
                $region61: #{_lambda_.1} parent=50 // loop_header_branch
                  %258 = sbr.rel (%p256) target = $region65
                $region62: #{_lambda_.1} parent=50 // loop_body
                  %v262 = vld [vmem:[%s260] sm:$0xf]
                  %263 = vst [vmem:[%s261] sm:$0xf] %v262
                  %v264 = vld [vmem:[%s260 + $0x8] sm:$0xf]
                  %265 = vst [vmem:[%s261 + $0x4] sm:$0xf] %v264
                $region63: #{_lambda_.1} parent=50 // loop_footer
                  %s259 = sadd.s32 1, %s255
                $region64: #{_lambda_.1} parent=50 // loop_footer_branch
                  %254 = sbr.rel target = $region60
                $region65: #{_lambda_.1} parent=50 // loop_exit
                  _
              $region51: #{_lambda_.1} parent=35 // pred_fallthru
                _
            $region36: #{_lambda_.1} parent=31 // pred_fallthru
              _
            // Predicated region
            $region37: #{_lambda_.1} parent=31 // pred_check
              _
            $region38: #{_lambda_.1} parent=31 // pred_check_branch
              %229 = sbr.rel (0) target = $region40
            $region39: #{_lambda_.1} parent=31 // pred_region
              loop: start=0, step=1, limit=1
              $region41: #{_lambda_.1} parent=39 // loop_pre_header
                _
              $region42: #{_lambda_.1} parent=39 // loop_header
                %s232 = sphi 0, %s236
                %p233 = scmp.ge.s32.totalorder %s232, 1
                %s237 = sphi %s223, %s223
                %s238 = sphi %s219, %s219
              $region43: #{_lambda_.1} parent=39 // loop_header_branch
                %235 = sbr.rel (%p233) target = $region47
              $region44: #{_lambda_.1} parent=39 // loop_body
                %v239 = vld [vmem:[%s237] sm:$0xf]
                %240 = vst [vmem:[%s238] sm:$0xf] %v239
                %v241 = vld [vmem:[%s237 + $0x8] sm:$0xf]
                %242 = vst [vmem:[%s238 + $0x4] sm:$0xf] %v241
              $region45: #{_lambda_.1} parent=39 // loop_footer
                %s236 = sadd.s32 1, %s232
              $region46: #{_lambda_.1} parent=39 // loop_footer_branch
                %231 = sbr.rel target = $region42
              $region47: #{_lambda_.1} parent=39 // loop_exit
                _
            $region40: #{_lambda_.1} parent=31 // pred_fallthru
              _
          $region32: #{_lambda_.1} parent=27 // pred_fallthru
            _
          %266 = vnop
        $region28: #{_lambda_.1} parent=23 // pred_fallthru
          _
        // Predicated region
        $region66: #{_lambda_.1} parent=23 // pred_check
          %p267 = pneg %p123
        $region67: #{_lambda_.1} parent=23 // pred_check_branch
          %269 = sbr.rel (%p267) target = $region69
        $region68: #{_lambda_.1} parent=23 // pred_region
          %s270 = sand.u32 %s113, 1
          %s271 = sand.u32 %s113, 1
          %s272 = smul.addr %s271, 8
          %s273 = scalar_lea.vmem [#allocation3], %s272
          %s274 = sadd.s32 %s19, 1
          %s275 = smul.addr %s20, 4
          %s276 = sadd.s32 %s274, %s275
          %s277 = smul.addr %s276, 4
          %s278 = scalar_lea.vmem %s3, %s277
          // Predicated region
          $region70: #{_lambda_.1} parent=68 // pred_check
            _
          $region71: #{_lambda_.1} parent=68 // pred_check_branch
            %280 = sbr.rel (0) target = $region73
          $region72: #{_lambda_.1} parent=68 // pred_region
            // Predicated region
            $region74: #{_lambda_.1} parent=72 // pred_check
              _
            $region75: #{_lambda_.1} parent=72 // pred_check_branch
              %282 = sbr.rel target = $region77
            $region76: #{_lambda_.1} parent=72 // pred_region
              // Predicated region
              $region89: #{_lambda_.1} parent=76 // pred_check
                _
              $region90: #{_lambda_.1} parent=76 // pred_check_branch
                %299 = sbr.rel (0) target = $region92
              $region91: #{_lambda_.1} parent=76 // pred_region
                loop: start=0, step=1, limit=1
                $region93: #{_lambda_.1} parent=91 // loop_pre_header
                  _
                $region94: #{_lambda_.1} parent=91 // loop_header
                  %s301 = sphi 0, %s305
                  %p302 = scmp.ge.s32.totalorder %s301, 1
                  %s306 = sphi %s278, %s278
                  %s307 = sphi %s273, %s273
                $region95: #{_lambda_.1} parent=91 // loop_header_branch
                  %304 = sbr.rel (%p302) target = $region99
                $region96: #{_lambda_.1} parent=91 // loop_body
                  _
                $region97: #{_lambda_.1} parent=91 // loop_footer
                  %s305 = sadd.s32 1, %s301
                $region98: #{_lambda_.1} parent=91 // loop_footer_branch
                  %300 = sbr.rel target = $region94
                $region99: #{_lambda_.1} parent=91 // loop_exit
                  _
                loop: start=0, step=1, limit=1
                $region100: #{_lambda_.1} parent=91 // loop_pre_header
                  _
                $region101: #{_lambda_.1} parent=91 // loop_header
                  %s310 = sphi 0, %s314
                  %p311 = scmp.ge.s32.totalorder %s310, 1
                  %s315 = sphi %s278, %s278
                  %s316 = sphi %s273, %s273
                $region102: #{_lambda_.1} parent=91 // loop_header_branch
                  %313 = sbr.rel (%p311) target = $region106
                $region103: #{_lambda_.1} parent=91 // loop_body
                  %v317 = vld [vmem:[%s315] sm:$0xf]
                  %318 = vst [vmem:[%s316] sm:$0xf] %v317
                  %v319 = vld [vmem:[%s315 + $0x8] sm:$0xf]
                  %320 = vst [vmem:[%s316 + $0x4] sm:$0xf] %v319
                $region104: #{_lambda_.1} parent=91 // loop_footer
                  %s314 = sadd.s32 1, %s310
                $region105: #{_lambda_.1} parent=91 // loop_footer_branch
                  %309 = sbr.rel target = $region101
                $region106: #{_lambda_.1} parent=91 // loop_exit
                  _
              $region92: #{_lambda_.1} parent=76 // pred_fallthru
                _
            $region77: #{_lambda_.1} parent=72 // pred_fallthru
              _
            // Predicated region
            $region78: #{_lambda_.1} parent=72 // pred_check
              _
            $region79: #{_lambda_.1} parent=72 // pred_check_branch
              %284 = sbr.rel (0) target = $region81
            $region80: #{_lambda_.1} parent=72 // pred_region
              loop: start=0, step=1, limit=1
              $region82: #{_lambda_.1} parent=80 // loop_pre_header
                _
              $region83: #{_lambda_.1} parent=80 // loop_header
                %s287 = sphi 0, %s291
                %p288 = scmp.ge.s32.totalorder %s287, 1
                %s292 = sphi %s278, %s278
                %s293 = sphi %s273, %s273
              $region84: #{_lambda_.1} parent=80 // loop_header_branch
                %290 = sbr.rel (%p288) target = $region88
              $region85: #{_lambda_.1} parent=80 // loop_body
                %v294 = vld [vmem:[%s292] sm:$0xf]
                %295 = vst [vmem:[%s293] sm:$0xf] %v294
                %v296 = vld [vmem:[%s292 + $0x8] sm:$0xf]
                %297 = vst [vmem:[%s293 + $0x4] sm:$0xf] %v296
              $region86: #{_lambda_.1} parent=80 // loop_footer
                %s291 = sadd.s32 1, %s287
              $region87: #{_lambda_.1} parent=80 // loop_footer_branch
                %286 = sbr.rel target = $region83
              $region88: #{_lambda_.1} parent=80 // loop_exit
                _
            $region81: #{_lambda_.1} parent=72 // pred_fallthru
              _
          $region73: #{_lambda_.1} parent=68 // pred_fallthru
            _
          %321 = vnop
        $region69: #{_lambda_.1} parent=23 // pred_fallthru
          _
      $region24: #{_lambda_.1} parent=5 // pred_fallthru
        _
      %p322 = scmp.le.s32.totalorder 1, %s12
      %p323 = scmp.lt.s32.totalorder %s12, 3
      %p324 = pnand %p322, %p323
      %p325 = pneg %p324
      // Predicated region
      $region107: #{_lambda_.1} parent=5 // pred_check
        _
      $region108: #{_lambda_.1} parent=5 // pred_check_branch
        %327 = sbr.rel (%p324) target = $region110
      $region109: #{_lambda_.1} parent=5 // pred_region
        %s328 = ssub.s32 %s12, 1
        %s329 = sand.u32 %s86, 1
        %s330 = sand.u32 %s86, 1
        %s331 = smul.addr %s330, 8
        %s332 = scalar_lea.vmem [#allocation2], %s331
        // Predicated region
        $region111: #{_lambda_.1} parent=109 // pred_check
          %p333 = pneg %p99
        $region112: #{_lambda_.1} parent=109 // pred_check_branch
          %335 = sbr.rel (%p333) target = $region114
        $region113: #{_lambda_.1} parent=109 // pred_region
          _
        $region114: #{_lambda_.1} parent=109 // pred_fallthru
          _
        %s336 = sand.u32 %s116, 1
        %s337 = sand.u32 %s116, 1
        %s338 = smul.addr %s337, 8
        %s339 = scalar_lea.vmem [#allocation3], %s338
        // Predicated region
        $region115: #{_lambda_.1} parent=109 // pred_check
          %p340 = pneg %p129
        $region116: #{_lambda_.1} parent=109 // pred_check_branch
          %342 = sbr.rel (%p340) target = $region118
        $region117: #{_lambda_.1} parent=109 // pred_region
          _
        $region118: #{_lambda_.1} parent=109 // pred_fallthru
          _
        %p343 = pneg %p45
        %p344 = pneg %p42
        %p345 = scmp.lt.s32.totalorder %s21, 0
        %s346 = scalar_select %p345, %s21, 0
        %s347 = scalar_lea.vmem %s1, %s346
        %p348 = pneg %p71
        %p349 = pneg %p68
        %s350 = sand.u32 %s86, 1
        %s351 = sand.u32 %s86, 1
        %s352 = smul.addr %s351, 8
        %s353 = scalar_lea.vmem [#allocation2], %s352
        %p354 = pneg %p99
        %p355 = pneg %p96
        %s356 = sand.u32 %s116, 1
        %s357 = sand.u32 %s116, 1
        %s358 = smul.addr %s357, 8
        %s359 = scalar_lea.vmem [#allocation3], %s358
        %p360 = pneg %p129
        %p361 = pneg %p126
        %p362 = pneg %p157
        %p363 = pneg %p154
        %p364 = scmp.lt.s32.totalorder %s22, 1
        %s365 = scalar_select %p364, %s22, 1
        %p366 = scmp.lt.s32.totalorder %s21, 0
        %s367 = scalar_select %p366, %s21, 0
        %s368 = sadd.s32 %s367, %s365
        %s369 = smul.addr %s368, 4
        %s370 = scalar_lea.vmem %s4, %s369
        %p371 = pneg %p185
        %p372 = pneg %p182
        %p373 = scmp.lt.s32.totalorder %s21, 0
        %s374 = scalar_select %p373, %s21, 0
        %p375 = scmp.lt.s32.totalorder %s22, 1
        %s376 = scalar_select %p375, %s22, 1
        %s377 = smul.addr %s376, 2
        %s378 = smul.addr %s374, 4
        %s379 = sadd.s32 %s377, %s378
        %s380 = smul.addr %s379, 8
        %s381 = scalar_lea.vmem %s5, %s380
        %p382 = scmp.lt.s32.totalorder %s21, 0
        %s383 = scalar_select %p382, %s21, 0
        %s384 = scalar_lea.vmem %s1, %s383
        %s385 = sadd.s32 %s21, 1
        %p386 = scmp.lt.s32.totalorder %s22, 1
        %s387 = scalar_select %p386, %s22, 1
        %p388 = scmp.lt.s32.totalorder %s21, 0
        %s389 = scalar_select %p388, %s21, 0
        %s390 = sadd.s32 %s389, %s387
        %s391 = smul.addr %s390, 4
        %s392 = scalar_lea.vmem %s4, %s391
        %p393 = scmp.lt.s32.totalorder %s21, 0
        %s394 = scalar_select %p393, %s21, 0
        %p395 = scmp.lt.s32.totalorder %s22, 1
        %s396 = scalar_select %p395, %s22, 1
        %s397 = smul.addr %s396, 2
        %s398 = smul.addr %s394, 4
        %s399 = sadd.s32 %s397, %s398
        %s400 = smul.addr %s399, 8
        %s401 = scalar_lea.vmem %s5, %s400
        %v403 = vld [vmem:[%s332] sm:$0xf]
        %v404 = vld [vmem:[%s332 + $0x4] sm:$0xf]
        %v405 = vld [vmem:[%s339] sm:$0xf]
        %v406 = vld [vmem:[%s339 + $0x4] sm:$0xf]
        %v409 = vunpack.c.l.b16 %v403
        %v410 = vunpack.c.l.b16 %v404
        %v411 = vpack.c.b16 %v410, %v409
        %v415 = vunpack.c.l.b16 %v405
        %v416 = vunpack.c.l.b16 %v406
        %v417 = vpack.c.b16 %v416, %v415
        %v418 = vld [vmem:[%s0] sm:$0xf]
        %s419 = scalar_lea.vmem %s0, 4
        %v420 = vld [vmem:[%s419] sm:$0xf]
        %421 = vrot.lane.b32.xlu0 %v411, 127
        %v422 = vpop.permute.xlu0 %421
        %423 = vrot.lane.b32.xlu0 %v417, 127
        %v424 = vpop.permute.xlu0 %423
        %vm425 = vcmask 1039360
        %v426 = vsel %vm425, %v422, %v424
        %vm428 = vcmask 130048
        %v430 = vsel %vm428, %v420, 0
        %432 = vmatprep.subr.bf16.mxu0 0
        %433 = vmatpush1.bf16.msra.mxu0 %v426
        %434 = vmatprep.subr.bf16.mxu0 0
        %435 = vmatpush1.bf16.msra.mxu0 0
        %436 = vmatprep.subr.bf16.mxu0 0
        %437 = vmatpush1.bf16.msra.mxu0 0
        %438 = vmatprep.subr.bf16.mxu0 0
        %439 = vmatpush1.bf16.msra.mxu0 0
        %440 = vmatprep.subr.bf16.mxu0 0
        %441 = vmatpush1.bf16.msra.mxu0 0
        %442 = vmatprep.subr.bf16.mxu0 0
        %443 = vmatpush1.bf16.msra.mxu0 0
        %444 = vmatprep.subr.bf16.mxu0 0
        %445 = vmatpush1.bf16.msra.mxu0 0
        %446 = vmatprep.subr.bf16.mxu0 0
        %447 = vmatpush1.bf16.msra.mxu0 0
        %448 = vmatprep.subr.bf16.mxu0 0
        %449 = vmatpush1.bf16.msra.mxu0 0
        %450 = vmatprep.subr.bf16.mxu0 0
        %451 = vmatpush1.bf16.msra.mxu0 0
        %452 = vmatprep.subr.bf16.mxu0 0
        %453 = vmatpush1.bf16.msra.mxu0 0
        %454 = vmatprep.subr.bf16.mxu0 0
        %455 = vmatpush1.bf16.msra.mxu0 0
        %456 = vmatprep.subr.bf16.mxu0 0
        %457 = vmatpush1.bf16.msra.mxu0 0
        %458 = vmatprep.subr.bf16.mxu0 0
        %459 = vmatpush1.bf16.msra.mxu0 0
        %460 = vmatprep.subr.bf16.mxu0 0
        %461 = vmatpush1.bf16.msra.mxu0 0
        %462 = vmatprep.subr.bf16.mxu0 0
        %463 = vmatpush1.bf16.msra.mxu0 0
        %464 = vmatprep.mubr.bf16.mxu0 0
        %465 = vmatmul.mubr.bf16.gmra.mrb[0].mxu0 %v430
        %v466 = vpop.f32.mrb[0].mxu0
        %v467 = vadd.f32 0.0, %v466
        %v468 = vpop.f32.mrb[0].mxu0
        %v469 = vpop.f32.mrb[0].mxu0
        %v470 = vpop.f32.mrb[0].mxu0
        %471 = vdwg.mxu0
        %v473 = vsel %vm428, %v418, 0
        %475 = vmatprep.subr.bf16.mxu0 0
        %476 = vmatpush1.bf16.msra.mxu0 %v411
        %477 = vmatprep.subr.bf16.mxu0 0
        %478 = vmatpush1.bf16.msra.mxu0 0
        %479 = vmatprep.subr.bf16.mxu0 0
        %480 = vmatpush1.bf16.msra.mxu0 0
        %481 = vmatprep.subr.bf16.mxu0 0
        %482 = vmatpush1.bf16.msra.mxu0 0
        %483 = vmatprep.subr.bf16.mxu0 0
        %484 = vmatpush1.bf16.msra.mxu0 0
        %485 = vmatprep.subr.bf16.mxu0 0
        %486 = vmatpush1.bf16.msra.mxu0 0
        %487 = vmatprep.subr.bf16.mxu0 0
        %488 = vmatpush1.bf16.msra.mxu0 0
        %489 = vmatprep.subr.bf16.mxu0 0
        %490 = vmatpush1.bf16.msra.mxu0 0
        %491 = vmatprep.subr.bf16.mxu0 0
        %492 = vmatpush1.bf16.msra.mxu0 0
        %493 = vmatprep.subr.bf16.mxu0 0
        %494 = vmatpush1.bf16.msra.mxu0 0
        %495 = vmatprep.subr.bf16.mxu0 0
        %496 = vmatpush1.bf16.msra.mxu0 0
        %497 = vmatprep.subr.bf16.mxu0 0
        %498 = vmatpush1.bf16.msra.mxu0 0
        %499 = vmatprep.subr.bf16.mxu0 0
        %500 = vmatpush1.bf16.msra.mxu0 0
        %501 = vmatprep.subr.bf16.mxu0 0
        %502 = vmatpush1.bf16.msra.mxu0 0
        %503 = vmatprep.subr.bf16.mxu0 0
        %504 = vmatpush1.bf16.msra.mxu0 0
        %505 = vmatprep.subr.bf16.mxu0 0
        %506 = vmatpush1.bf16.msra.mxu0 0
        %507 = vmatprep.mubr.bf16.mxu0 0
        %508 = vmatmul.mubr.bf16.gmra.mrb[0].mxu0 %v473
        %v509 = vpop.f32.mrb[0].mxu0
        %v510 = vadd.f32 %v467, %v509
        %v511 = vpop.f32.mrb[0].mxu0
        %v512 = vpop.f32.mrb[0].mxu0
        %v513 = vpop.f32.mrb[0].mxu0
        %514 = vdwg.mxu0
        %s515 = scalar_lea.vmem %s0, 8
        %v516 = vld [vmem:[%s515] sm:$0xf]
        %517 = vrot.lane.b32.xlu0 %v411, 119
        %v518 = vpop.permute.xlu0 %517
        %519 = vrot.lane.b32.xlu0 %v417, 119
        %v520 = vpop.permute.xlu0 %519
        %vm521 = vcmask 973824
        %v522 = vsel %vm521, %v518, %v520
        %v525 = vsel %vm428, %v516, 0
        %527 = vmatprep.subr.bf16.mxu0 0
        %528 = vmatpush1.bf16.msra.mxu0 %v522
        %529 = vmatprep.subr.bf16.mxu0 0
        %530 = vmatpush1.bf16.msra.mxu0 0
        %531 = vmatprep.subr.bf16.mxu0 0
        %532 = vmatpush1.bf16.msra.mxu0 0
        %533 = vmatprep.subr.bf16.mxu0 0
        %534 = vmatpush1.bf16.msra.mxu0 0
        %535 = vmatprep.subr.bf16.mxu0 0
        %536 = vmatpush1.bf16.msra.mxu0 0
        %537 = vmatprep.subr.bf16.mxu0 0
        %538 = vmatpush1.bf16.msra.mxu0 0
        %539 = vmatprep.subr.bf16.mxu0 0
        %540 = vmatpush1.bf16.msra.mxu0 0
        %541 = vmatprep.subr.bf16.mxu0 0
        %542 = vmatpush1.bf16.msra.mxu0 0
        %543 = vmatprep.subr.bf16.mxu0 0
        %544 = vmatpush1.bf16.msra.mxu0 0
        %545 = vmatprep.subr.bf16.mxu0 0
        %546 = vmatpush1.bf16.msra.mxu0 0
        %547 = vmatprep.subr.bf16.mxu0 0
        %548 = vmatpush1.bf16.msra.mxu0 0
        %549 = vmatprep.subr.bf16.mxu0 0
        %550 = vmatpush1.bf16.msra.mxu0 0
        %551 = vmatprep.subr.bf16.mxu0 0
        %552 = vmatpush1.bf16.msra.mxu0 0
        %553 = vmatprep.subr.bf16.mxu0 0
        %554 = vmatpush1.bf16.msra.mxu0 0
        %555 = vmatprep.subr.bf16.mxu0 0
        %556 = vmatpush1.bf16.msra.mxu0 0
        %557 = vmatprep.subr.bf16.mxu0 0
        %558 = vmatpush1.bf16.msra.mxu0 0
        %559 = vmatprep.mubr.bf16.mxu0 0
        %560 = vmatmul.mubr.bf16.gmra.mrb[0].mxu0 %v525
        %v561 = vpop.f32.mrb[0].mxu0
        %v562 = vadd.f32 0.0, %v561
        %v563 = vpop.f32.mrb[0].mxu0
        %v564 = vpop.f32.mrb[0].mxu0
        %v565 = vpop.f32.mrb[0].mxu0
        %566 = vdwg.mxu0
        %v567 = vadd.f32 %v510, %v562
        %s568 = scalar_lea.vmem %s0, 12
        %v569 = vld [vmem:[%s568] sm:$0xf]
        %570 = vrot.lane.b32.xlu0 %v411, 118
        %v571 = vpop.permute.xlu0 %570
        %572 = vrot.lane.b32.xlu0 %v417, 118
        %v573 = vpop.permute.xlu0 %572
        %vm574 = vcmask 965632
        %v575 = vsel %vm574, %v571, %v573
        %v578 = vsel %vm428, %v569, 0
        %580 = vmatprep.subr.bf16.mxu0 0
        %581 = vmatpush1.bf16.msra.mxu0 %v575
        %582 = vmatprep.subr.bf16.mxu0 0
        %583 = vmatpush1.bf16.msra.mxu0 0
        %584 = vmatprep.subr.bf16.mxu0 0
        %585 = vmatpush1.bf16.msra.mxu0 0
        %586 = vmatprep.subr.bf16.mxu0 0
        %587 = vmatpush1.bf16.msra.mxu0 0
        %588 = vmatprep.subr.bf16.mxu0 0
        %589 = vmatpush1.bf16.msra.mxu0 0
        %590 = vmatprep.subr.bf16.mxu0 0
        %591 = vmatpush1.bf16.msra.mxu0 0
        %592 = vmatprep.subr.bf16.mxu0 0
        %593 = vmatpush1.bf16.msra.mxu0 0
        %594 = vmatprep.subr.bf16.mxu0 0
        %595 = vmatpush1.bf16.msra.mxu0 0
        %596 = vmatprep.subr.bf16.mxu0 0
        %597 = vmatpush1.bf16.msra.mxu0 0
        %598 = vmatprep.subr.bf16.mxu0 0
        %599 = vmatpush1.bf16.msra.mxu0 0
        %600 = vmatprep.subr.bf16.mxu0 0
        %601 = vmatpush1.bf16.msra.mxu0 0
        %602 = vmatprep.subr.bf16.mxu0 0
        %603 = vmatpush1.bf16.msra.mxu0 0
        %604 = vmatprep.subr.bf16.mxu0 0
        %605 = vmatpush1.bf16.msra.mxu0 0
        %606 = vmatprep.subr.bf16.mxu0 0
        %607 = vmatpush1.bf16.msra.mxu0 0
        %608 = vmatprep.subr.bf16.mxu0 0
        %609 = vmatpush1.bf16.msra.mxu0 0
        %610 = vmatprep.subr.bf16.mxu0 0
        %611 = vmatpush1.bf16.msra.mxu0 0
        %612 = vmatprep.mubr.bf16.mxu0 0
        %613 = vmatmul.mubr.bf16.gmra.mrb[0].mxu0 %v578
        %v614 = vpop.f32.mrb[0].mxu0
        %v615 = vadd.f32 0.0, %v614
        %v616 = vpop.f32.mrb[0].mxu0
        %v617 = vpop.f32.mrb[0].mxu0
        %v618 = vpop.f32.mrb[0].mxu0
        %619 = vdwg.mxu0
        %v620 = vadd.f32 %v567, %v615
        %v621 = vld [vmem:[%s384] sm:$0x1]
        %v622 = vunpack.c.l.bf16 %v621
        %v623 = vlaneseq
        %v624 = vshrl.u32 %v623, 7
        %v625 = vsub.s32 0, %v624
        %v626 = vrot.slane %v622, %v625
        %v627 = vmul.f32 %v620, %v626
        %628 = vadd.xlane.f32.xlu0 %v627
        %v629 = vpop.xlane.xlu0 %628
        %v630 = vmul.f32 %v627, %v620
        %631 = vadd.xlane.f32.xlu0 %v630
        %v632 = vpop.xlane.xlu0 %631
        %634 = vset.pattern.permute.xlu0 0
        %635 = vperm.xlu0 %634, %v629
        %v636 = vpop.permute.xlu0 %635
        %639 = vset.pattern.permute.xlu0 0
        %640 = vperm.xlu0 %639, %v632
        %v641 = vpop.permute.xlu0 %640
        %643 = vst [vmem:[%s401] sm:$0xff] %v636
        %644 = vst [vmem:[%s401 + $0x8] sm:$0xff] %v641
        %v645 = vpack.c.bf16 %v620, %v620
        %646 = vst [vmem:[%s392] sm:$0xf] %v645
        %p647 = scmp.lt.s32.totalorder %s22, 1
        %s648 = scalar_select %p647, %s22, 1
        %p649 = scmp.lt.s32.totalorder %s21, 0
        %s650 = scalar_select %p649, %s21, 0
        %s651 = sadd.s32 %s650, %s648
        %s652 = smul.addr %s651, 4
        %s653 = scalar_lea.vmem %s4, %s652
        %p654 = scmp.lt.s32.totalorder %s21, 0
        %s655 = scalar_select %p654, %s21, 0
        %p656 = scmp.lt.s32.totalorder %s22, 1
        %s657 = scalar_select %p656, %s22, 1
        %s658 = smul.addr %s657, 2
        %s659 = smul.addr %s655, 4
        %s660 = sadd.s32 %s658, %s659
        %s661 = smul.addr %s660, 8
        %s662 = scalar_lea.vmem %s5, %s661
        // Predicated region
        $region119: #{_lambda_.1} parent=109 // pred_check
          %p663 = pneg %p154
        $region120: #{_lambda_.1} parent=109 // pred_check_branch
          %665 = sbr.rel (%p663) target = $region122
        $region121: #{_lambda_.1} parent=109 // pred_region
          _
        $region122: #{_lambda_.1} parent=109 // pred_fallthru
          _
        // Predicated region
        $region123: #{_lambda_.1} parent=109 // pred_check
          %p666 = pneg %p182
        $region124: #{_lambda_.1} parent=109 // pred_check_branch
          %668 = sbr.rel (%p666) target = $region126
        $region125: #{_lambda_.1} parent=109 // pred_region
          _
        $region126: #{_lambda_.1} parent=109 // pred_fallthru
          _
      $region110: #{_lambda_.1} parent=5 // pred_fallthru
        _
      %p669 = scmp.le.s32.totalorder 2, %s12
      // Predicated region
      $region127: #{_lambda_.1} parent=5 // pred_check
        %p670 = pneg %p669
      $region128: #{_lambda_.1} parent=5 // pred_check_branch
        %672 = sbr.rel (%p670) target = $region130
      $region129: #{_lambda_.1} parent=5 // pred_region
        %s673 = ssub.s32 %s12, 2
        // Predicated region
        $region131: #{_lambda_.1} parent=129 // pred_check
          %p674 = pneg %p160
        $region132: #{_lambda_.1} parent=129 // pred_check_branch
          %676 = sbr.rel (%p674) target = $region134
        $region133: #{_lambda_.1} parent=129 // pred_region
          %p677 = scmp.lt.s32.totalorder %s24, 1
          %s678 = scalar_select %p677, %s24, 1
          %p679 = scmp.lt.s32.totalorder %s23, 0
          %s680 = scalar_select %p679, %s23, 0
          %s681 = sadd.s32 %s680, %s678
          %s682 = smul.addr %s681, 4
          %s683 = scalar_lea.vmem %s4, %s682
        $region134: #{_lambda_.1} parent=129 // pred_fallthru
          _
        // Predicated region
        $region135: #{_lambda_.1} parent=129 // pred_check
          %p684 = pneg %p188
        $region136: #{_lambda_.1} parent=129 // pred_check_branch
          %686 = sbr.rel (%p684) target = $region138
        $region137: #{_lambda_.1} parent=129 // pred_region
          %p687 = scmp.lt.s32.totalorder %s23, 0
          %s688 = scalar_select %p687, %s23, 0
          %p689 = scmp.lt.s32.totalorder %s24, 1
          %s690 = scalar_select %p689, %s24, 1
          %s691 = smul.addr %s690, 2
          %s692 = smul.addr %s688, 4
          %s693 = sadd.s32 %s691, %s692
          %s694 = smul.addr %s693, 8
          %s695 = scalar_lea.vmem %s5, %s694
        $region138: #{_lambda_.1} parent=129 // pred_fallthru
          _
      $region130: #{_lambda_.1} parent=5 // pred_fallthru
        _
    $region6: #{_lambda_.1} parent=1 // loop_footer
      %s16 = sadd.s32 1, %s12
    $region7: #{_lambda_.1} parent=1 // loop_footer_branch
      %11 = sbr.rel target = $region3
    $region8: #{_lambda_.1} parent=1 // loop_exit
      _

</llo_original>
